<compile_context>
chip_gen: v7x
topology: tpu7x:2x2x1
jax: 0.10.0
libtpu: 0.0.40
codegen_flags: <defaults>
</compile_context>

<pallas_src>
import functools

import jax
import jax.numpy as jnp
from jax.experimental import pallas as pl
from jax.experimental.pallas import tpu as pltpu


def _round_up(x, m):
    return ((x + m - 1) // m) * m


def _weight_drop_linear_kernel(x_ref, w_ref, bits_ref, b_ref, o_ref, acc_ref,
                               *, apply_dropout, keep_threshold, scale):
    """One (N-tile, K-tile) grid step of y = x @ dropout(w) + b.

    x_ref    : (B, tk)            activations, K-slice
    w_ref    : (tk, tn)           weight stored as (K, N) -> straight MXU feed
    bits_ref : (tk, tn) or (1,tn) uint32 random bits (elementwise / variational)
    b_ref    : (1, tn)            bias slice
    o_ref    : (B, tn)            output tile (resident across the K axis)
    acc_ref  : (B, tn) f32        accumulator scratch
    """
    k = pl.program_id(1)

    @pl.when(k == 0)
    def _init():
        acc_ref[...] = jnp.zeros_like(acc_ref)

    w = w_ref[...].astype(jnp.float32)
    if apply_dropout:
        # keep with prob (1 - p): P(bits >= round(p * 2^32)) == 1 - p
        keep = bits_ref[...] >= jnp.uint32(keep_threshold)
        w = jnp.where(keep, w * jnp.float32(scale), jnp.float32(0.0))

    # bf16 MXU matmul, f32 accumulation.
    acc_ref[...] += jnp.dot(
        x_ref[...].astype(jnp.bfloat16),
        w.astype(jnp.bfloat16),
        preferred_element_type=jnp.float32,
    )

    @pl.when(k == pl.num_programs(1) - 1)
    def _finalize():
        o_ref[...] = (acc_ref[...] + b_ref[...]).astype(o_ref.dtype)


def weight_drop_linear(x, w_raw, b, key, *, dropout=0.5, variational=False,
                       training=True, tile_n=256, tile_k=512):
    """Forward of weight_drop(nn.Linear(K, N), ['weight'], dropout).

    x     : (B, K)   activations
    w_raw : (N, K)   raw Linear weight (PyTorch convention)
    b     : (N,)     bias
    key   : jax PRNG key driving the dropout mask
    """
    B, K = x.shape
    N, K2 = w_raw.shape
    assert K == K2, "weight / input feature mismatch"
    dropout = float(dropout)

    # In the torch module, the variational branch always applies dropout
    # (training=True); the standard branch respects self.training.
    apply_dropout = (dropout > 0.0) and (variational or training)

    # (K, N) layout: no transposed RHS into the MXU; variational mask is (1, N).
    w_t = w_raw.T

    if apply_dropout and dropout >= 1.0:
        # p == 1 drops everything; avoid 1/(1-p) overflow.
        w_t = jnp.zeros_like(w_t)
        apply_dropout = False

    # Tile sizes: multiples of 128 on the lane-facing dims, clamped to the
    # (padded) problem size so small layers stay a single block.
    tn = min(int(tile_n), _round_up(N, 128))
    tk = min(int(tile_k), _round_up(K, 128))
    Np = _round_up(N, tn)
    Kp = _round_up(K, tk)

    # Zero-pad to lane-dense shapes (padding contributes 0 to the matmul).
    x_p = jnp.pad(x, ((0, 0), (0, Kp - K)))
    w_p = jnp.pad(w_t, ((0, Kp - K), (0, Np - N)))
    b_p = jnp.pad(b.reshape(1, N).astype(jnp.float32), ((0, 0), (0, Np - N)))

    if apply_dropout:
        keep_threshold = min(int(round(dropout * 2.0 ** 32)), 2 ** 32 - 1)
        scale = 1.0 / (1.0 - dropout)
        bits_shape = (1, Np) if variational else (Kp, Np)
        bits = jax.random.bits(key, bits_shape, dtype=jnp.uint32)
    else:
        keep_threshold = 0
        scale = 1.0
        bits = jnp.zeros((1, Np), dtype=jnp.uint32)   # dummy, never read

    bits_is_row = bits.shape[0] == 1
    bits_block = (1, tn) if bits_is_row else (tk, tn)
    bits_index = (lambda j, k: (0, j)) if bits_is_row else (lambda j, k: (k, j))

    kernel = functools.partial(
        _weight_drop_linear_kernel,
        apply_dropout=apply_dropout,
        keep_threshold=keep_threshold,
        scale=scale,
    )

    grid = (Np // tn, Kp // tk)   # (N tiles -> parallel, K tiles -> reduction)

    grid_spec = pltpu.PrefetchScalarGridSpec(
        num_scalar_prefetch=0,
        grid=grid,
        in_specs=[
            pl.BlockSpec((B, tk), lambda j, k: (0, k)),    # x
            pl.BlockSpec((tk, tn), lambda j, k: (k, j)),   # weight (K, N)
            pl.BlockSpec(bits_block, bits_index),          # random bits
            pl.BlockSpec((1, tn), lambda j, k: (0, j)),    # bias
        ],
        out_specs=pl.BlockSpec((B, tn), lambda j, k: (0, j)),
        scratch_shapes=[pltpu.VMEM((B, tn), jnp.float32)],
    )

    out = pl.pallas_call(
        kernel,
        out_shape=jax.ShapeDtypeStruct((B, Np), x.dtype),
        grid_spec=grid_spec,
        compiler_params=pltpu.CompilerParams(
            dimension_semantics=("parallel", "arbitrary")),
    )(x_p, w_p, bits, b_p)

    return out[:, :N]


if __name__ == "__main__":
    # Small shapes consistent with a Linear(in=32 -> out=16) wrapped in weight_drop.
    key = jax.random.PRNGKey(0)
    kx, kw, kb, kd0, kd1 = jax.random.split(key, 5)

    batch, in_features, out_features = 8, 32, 16
    dropout_p = 0.5

    x = jax.random.normal(kx, (batch, in_features), dtype=jnp.float32)
    w_raw = jax.random.normal(kw, (out_features, in_features), dtype=jnp.float32) * 0.1
    b = jax.random.normal(kb, (out_features,), dtype=jnp.float32) * 0.1

    # Standard (non-variational) weight dropout, training mode.
    y = weight_drop_linear(x, w_raw, b, kd0, dropout=dropout_p,
                           variational=False, training=True)
    jax.block_until_ready(y)
    assert y.shape == (batch, out_features)

    # Variational path (one mask value per output row, shared across in_features).
    y_var = weight_drop_linear(x, w_raw, b, kd1, dropout=dropout_p,
                               variational=True, training=True)
    jax.block_until_ready(y_var)
    assert y_var.shape == (batch, out_features)

    # Eval mode: no dropout -> plain linear; sanity check vs reference
    # (loose tolerance: bf16 MXU inputs, f32 accumulation).
    y_eval = weight_drop_linear(x, w_raw, b, kd0, dropout=dropout_p,
                                variational=False, training=False)
    jax.block_until_ready(y_eval)
    y_ref = x @ w_raw.T + b
    assert jnp.allclose(y_eval, y_ref, atol=5e-2, rtol=5e-2), "eval-mode mismatch"

    print("KERNEL_OK")
</pallas_src>

<mosaic_0001>
module attributes {stable_mosaic.version = 11 : i64} {
  func.func @_weight_drop_linear_kernel(%arg0: i32, %arg1: i32, %arg2: memref<8x128xf32, #tpu.memory_space<vmem>>, %arg3: memref<128x128xf32, #tpu.memory_space<vmem>>, %arg4: memref<128x128xi32, #tpu.memory_space<vmem>>, %arg5: memref<1x128xf32, #tpu.memory_space<vmem>>, %arg6: memref<8x128xf32, #tpu.memory_space<vmem>>, %arg7: memref<8x128xf32, #tpu.memory_space<vmem>>) attributes {dimension_semantics = [#tpu.dimension_semantics<parallel>, #tpu.dimension_semantics<arbitrary>], iteration_bounds = array<i64: 1, 1>, scalar_prefetch = 0 : i64, scratch_operands = 1 : i64, tpu.core_type = #tpu.core_type<tc>, window_params = [{transform_indices = @transform_0, window_bounds = array<i64: 8, 128>}, {transform_indices = @transform_1, window_bounds = array<i64: 128, 128>}, {transform_indices = @transform_2, window_bounds = array<i64: 128, 128>}, {transform_indices = @transform_3, window_bounds = array<i64: 1, 128>}, {transform_indices = @transform_4, window_bounds = array<i64: 8, 128>}]} {
    %c0_i32 = arith.constant 0 : i32
    %0 = arith.cmpi eq, %arg1, %c0_i32 : i32
    %1 = arith.extui %0 : i1 to i32
    %c0_i32_0 = arith.constant 0 : i32
    %2 = arith.cmpi ne, %1, %c0_i32_0 : i32
    scf.if %2 {
      %cst_14 = arith.constant 0.000000e+00 : f32
      %21 = vector.broadcast %cst_14 : f32 to vector<8x128xf32>
      %c0_15 = arith.constant 0 : index
      %c0_16 = arith.constant 0 : index
      %22 = vector.load %arg7[%c0_15, %c0_16] : memref<8x128xf32, #tpu.memory_space<vmem>>, vector<8x128xf32>
      tpu.vector_store %arg7[%c0_15, %c0_16], %21 {strides = array<i32>} : memref<8x128xf32, #tpu.memory_space<vmem>>, vector<8x128xf32>,
    } else {
    }
    %c0 = arith.constant 0 : index
    %c0_1 = arith.constant 0 : index
    %3 = vector.load %arg3[%c0, %c0_1] : memref<128x128xf32, #tpu.memory_space<vmem>>, vector<128x128xf32>
    %c0_2 = arith.constant 0 : index
    %c0_3 = arith.constant 0 : index
    %4 = vector.load %arg4[%c0_2, %c0_3] : memref<128x128xi32, #tpu.memory_space<vmem>>, vector<128x128xi32>
    %c-2147483648_i32 = arith.constant -2147483648 : i32
    %5 = vector.broadcast %c-2147483648_i32 : i32 to vector<128x128xi32>
    %6 = arith.cmpi uge, %4, %5 : vector<128x128xi32>
    %cst = arith.constant 2.000000e+00 : f32
    %7 = vector.broadcast %cst : f32 to vector<128x128xf32>
    %8 = arith.mulf %3, %7 : vector<128x128xf32>
    %cst_4 = arith.constant 0.000000e+00 : f32
    %9 = vector.broadcast %cst_4 : f32 to vector<128x128xf32>
    %10 = arith.select %6, %8, %9 : vector<128x128xi1>, vector<128x128xf32>
    %c0_5 = arith.constant 0 : index
    %c0_6 = arith.constant 0 : index
    %11 = vector.load %arg7[%c0_5, %c0_6] : memref<8x128xf32, #tpu.memory_space<vmem>>, vector<8x128xf32>
    %c0_7 = arith.constant 0 : index
    %c0_8 = arith.constant 0 : index
    %12 = vector.load %arg2[%c0_7, %c0_8] : memref<8x128xf32, #tpu.memory_space<vmem>>, vector<8x128xf32>
    %13 = arith.truncf %12 : vector<8x128xf32> to vector<8x128xbf16>
    %14 = arith.truncf %10 : vector<128x128xf32> to vector<128x128xbf16>
    %cst_9 = arith.constant dense<0.000000e+00> : vector<8x128xf32>
    %15 = tpu.matmul %13, %14, %cst_9 {dimension_numbers = #tpu.dot_dimension_numbers<[1], [0], [0], [1], [0, 0, 1, 1], [], []>} : vector<8x128xbf16>, vector<128x128xbf16>, vector<8x128xf32> -> vector<8x128xf32>
    %16 = arith.addf %11, %15 : vector<8x128xf32>
    %c0_10 = arith.constant 0 : index
    %c0_11 = arith.constant 0 : index
    %17 = vector.load %arg7[%c0_10, %c0_11] : memref<8x128xf32, #tpu.memory_space<vmem>>, vector<8x128xf32>
    tpu.vector_store %arg7[%c0_10, %c0_11], %16 {strides = array<i32>} : memref<8x128xf32, #tpu.memory_space<vmem>>, vector<8x128xf32>,
    %c0_i32_12 = arith.constant 0 : i32
    %18 = arith.cmpi eq, %arg1, %c0_i32_12 : i32
    %19 = arith.extui %18 : i1 to i32
    %c0_i32_13 = arith.constant 0 : i32
    %20 = arith.cmpi ne, %19, %c0_i32_13 : i32
    scf.if %20 {
      %c0_14 = arith.constant 0 : index
      %c0_15 = arith.constant 0 : index
      %21 = vector.load %arg7[%c0_14, %c0_15] : memref<8x128xf32, #tpu.memory_space<vmem>>, vector<8x128xf32>
      %c0_16 = arith.constant 0 : index
      %c0_17 = arith.constant 0 : index
      %22 = vector.load %arg5[%c0_16, %c0_17] : memref<1x128xf32, #tpu.memory_space<vmem>>, vector<1x128xf32>
      %23 = vector.broadcast %22 : vector<1x128xf32> to vector<8x128xf32>
      %24 = arith.addf %21, %23 : vector<8x128xf32>
      %c0_18 = arith.constant 0 : index
      %c0_19 = arith.constant 0 : index
      %25 = vector.load %arg6[%c0_18, %c0_19] : memref<8x128xf32, #tpu.memory_space<vmem>>, vector<8x128xf32>
      tpu.vector_store %arg6[%c0_18, %c0_19], %24 {strides = array<i32>} : memref<8x128xf32, #tpu.memory_space<vmem>>, vector<8x128xf32>,
    } else {
    }
    return
  }
  func.func @transform_0(%arg0: i32, %arg1: i32) -> (i32, i32) {
    %c0_i32 = arith.constant 0 : i32
    %c0_i32_0 = arith.constant 0 : i32
    return %c0_i32, %arg1 : i32, i32
  }
  func.func @transform_1(%arg0: i32, %arg1: i32) -> (i32, i32) {
    %c0_i32 = arith.constant 0 : i32
    return %arg1, %arg0 : i32, i32
  }
  func.func @transform_2(%arg0: i32, %arg1: i32) -> (i32, i32) {
    %c0_i32 = arith.constant 0 : i32
    return %arg1, %arg0 : i32, i32
  }
  func.func @transform_3(%arg0: i32, %arg1: i32) -> (i32, i32) {
    %c0_i32 = arith.constant 0 : i32
    %c0_i32_0 = arith.constant 0 : i32
    return %c0_i32, %arg0 : i32, i32
  }
  func.func @transform_4(%arg0: i32, %arg1: i32) -> (i32, i32) {
    %c0_i32 = arith.constant 0 : i32
    %c0_i32_0 = arith.constant 0 : i32
    return %c0_i32, %arg0 : i32, i32
  }
}

</mosaic_0001>

<llo_original>
// kernel: tpu_custom_call.1
$region0: #{tpu_custom_call.1}
  #allocation0 [shape = 'u32[]', space=smem, size = 0x4, offset = 0x4, fixed_abs, tag = 'smem constant byte address 0x4 - core index']
  #allocation1 [shape = 'u32[144,128]{1,0:T(1,128)}', space=vmem, size = 0x12000, scoped, tag = 'internal scratch']
  #allocation2 [shape = 'f32[8,128]{1,0:T(8,128)}', space=vmem, size = 0x1000, scoped, tag = 'scratch operand']
  %s0 = inlined_call_operand.hbm [shape: f32[8,128], index: 0, kind: input, shape index: {}]
  %s1 = inlined_call_operand.hbm [shape: f32[128,128], index: 1, kind: input, shape index: {}]
  %s2 = inlined_call_operand.hbm [shape: u32[128,128], index: 2, kind: input, shape index: {}]
  %s3 = inlined_call_operand.vmem [shape: f32[1,128], index: 3, kind: input, shape index: {}]
  %s4 = inlined_call_operand.hbm [shape: f32[8,128], index: 4, kind: output, shape index: {}]
  %s5 = sld [smem:[#allocation0]]
  $region46: #{tpu_custom_call.1} parent=0
    _
  %s7 = ssub.s32 1, %s5
  %s8 = scalar_select 0, %s7, %s5
  $region1: #{tpu_custom_call.1} parent=0
    #allocation3 [shape = 'u8[4096]{0}', space=vmem, size = 0x1000, scoped, tag = 'input window, operand 0, single buffered']
    #allocation4 [shape = 's32[1]{0}', space=sflag, size = 0x4, scoped, tag = 'scoped memory for tpu_custom_call.1']
    #allocation5 [shape = 's32[1]{0}', space=sflag, size = 0x4, scoped, tag = 'scoped memory for tpu_custom_call.1']
    #allocation6 [shape = 'u8[65536]{0}', space=vmem, size = 0x10000, scoped, tag = 'input window, operand 1, single buffered']
    #allocation7 [shape = 's32[1]{0}', space=sflag, size = 0x4, scoped, tag = 'scoped memory for tpu_custom_call.1']
    #allocation8 [shape = 'u8[65536]{0}', space=vmem, size = 0x10000, scoped, tag = 'input window, operand 2, single buffered']
    #allocation9 [shape = 'u8[4096]{0}', space=vmem, size = 0x1000, scoped, tag = 'output window, operand 0, single buffered']
    %9 = vsyncpa [#allocation4], 0
    %10 = vsyncpa [#allocation7], 0
    %11 = vsyncpa [#allocation5], 0
    // Predicated region
    $region2: #{tpu_custom_call.1} parent=1 // pred_check
      _
    $region3: #{tpu_custom_call.1} parent=1 // pred_check_branch
      %13 = sbr.rel (0) target = $region5
    $region4: #{tpu_custom_call.1} parent=1 // pred_region
      %s15 = ssub.s32 128, 128
      %16 = vsyncadd [#allocation4], %s15
      %s18 = sshll.u32 [#allocation3], 4
      %s19 = int_to_ptr.vmem [resolvable:$true] %s18
      %21 = dma.hbm_to_vmem [thread:$0]  %s0, 128, %s19, [#allocation4]
    $region5: #{tpu_custom_call.1} parent=1 // pred_fallthru
      _
    // Predicated region
    $region6: #{tpu_custom_call.1} parent=1 // pred_check
      _
    $region7: #{tpu_custom_call.1} parent=1 // pred_check_branch
      %23 = sbr.rel (0) target = $region9
    $region8: #{tpu_custom_call.1} parent=1 // pred_region
      %s25 = ssub.s32 2048, 2048
      %26 = vsyncadd [#allocation7], %s25
      %s27 = sshll.u32 [#allocation6], 4
      %s28 = int_to_ptr.vmem [resolvable:$true] %s27
      %33 = dma.hbm_to_vmem [thread:$0]  %s1, 2048, %s28, [#allocation7], 128, 128, 8
    $region9: #{tpu_custom_call.1} parent=1 // pred_fallthru
      _
    // Predicated region
    $region10: #{tpu_custom_call.1} parent=1 // pred_check
      _
    $region11: #{tpu_custom_call.1} parent=1 // pred_check_branch
      %35 = sbr.rel (0) target = $region13
    $region12: #{tpu_custom_call.1} parent=1 // pred_region
      %s37 = ssub.s32 2048, 2048
      %38 = vsyncadd [#allocation7], %s37
      %s39 = sshll.u32 [#allocation8], 4
      %s40 = int_to_ptr.vmem [resolvable:$true] %s39
      %45 = dma.hbm_to_vmem [thread:$0]  %s2, 2048, %s40, [#allocation7], 128, 128, 8
    $region13: #{tpu_custom_call.1} parent=1 // pred_fallthru
      _
    // Predicated region
    $region14: #{tpu_custom_call.1} parent=1 // pred_check
      _
    $region15: #{tpu_custom_call.1} parent=1 // pred_check_branch
      %47 = sbr.rel (0) target = $region17
    $region16: #{tpu_custom_call.1} parent=1 // pred_region
      _
    $region17: #{tpu_custom_call.1} parent=1 // pred_fallthru
      _
    // Predicated region
    $region18: #{tpu_custom_call.1} parent=1 // pred_check
      _
    $region19: #{tpu_custom_call.1} parent=1 // pred_check_branch
      %49 = sbr.rel (0) target = $region21
    $region20: #{tpu_custom_call.1} parent=1 // pred_region
      %50 = dma.done [#allocation4], 128
    $region21: #{tpu_custom_call.1} parent=1 // pred_fallthru
      _
    // Predicated region
    $region22: #{tpu_custom_call.1} parent=1 // pred_check
      _
    $region23: #{tpu_custom_call.1} parent=1 // pred_check_branch
      %52 = sbr.rel (0) target = $region25
    $region24: #{tpu_custom_call.1} parent=1 // pred_region
      %53 = dma.done [#allocation7], 2048
    $region25: #{tpu_custom_call.1} parent=1 // pred_fallthru
      _
    // Predicated region
    $region26: #{tpu_custom_call.1} parent=1 // pred_check
      _
    $region27: #{tpu_custom_call.1} parent=1 // pred_check_branch
      %55 = sbr.rel (0) target = $region29
    $region28: #{tpu_custom_call.1} parent=1 // pred_region
      %56 = dma.done [#allocation7], 2048
    $region29: #{tpu_custom_call.1} parent=1 // pred_fallthru
      _
    %p58 = scmp.eq.s32.totalorder 0, 0
    // Predicated region
    $region30: #{tpu_custom_call.1} parent=1 // pred_check
      %p59 = pneg %p58
    $region31: #{tpu_custom_call.1} parent=1 // pred_check_branch
      %61 = sbr.rel (%p59) target = $region33
    $region32: #{tpu_custom_call.1} parent=1 // pred_region
      %62 = vst [vmem:[#allocation2] sm:$0xff] 0.0
    $region33: #{tpu_custom_call.1} parent=1 // pred_fallthru
      _
    %v63 = vld [vmem:[#allocation6] sm:$0xff]
    %v64 = vld [vmem:[#allocation6 + $0x8] sm:$0xff]
    %v65 = vld [vmem:[#allocation6 + $0x10] sm:$0xff]
    %v66 = vld [vmem:[#allocation6 + $0x18] sm:$0xff]
    %v67 = vld [vmem:[#allocation6 + $0x20] sm:$0xff]
    %v68 = vld [vmem:[#allocation6 + $0x28] sm:$0xff]
    %v69 = vld [vmem:[#allocation6 + $0x30] sm:$0xff]
    %v70 = vld [vmem:[#allocation6 + $0x38] sm:$0xff]
    %v71 = vld [vmem:[#allocation6 + $0x40] sm:$0xff]
    %v72 = vld [vmem:[#allocation6 + $0x48] sm:$0xff]
    %v73 = vld [vmem:[#allocation6 + $0x50] sm:$0xff]
    %v74 = vld [vmem:[#allocation6 + $0x58] sm:$0xff]
    %v75 = vld [vmem:[#allocation6 + $0x60] sm:$0xff]
    %v76 = vld [vmem:[#allocation6 + $0x68] sm:$0xff]
    %v77 = vld [vmem:[#allocation6 + $0x70] sm:$0xff]
    %v78 = vld [vmem:[#allocation6 + $0x78] sm:$0xff]
    %v79 = vld [vmem:[#allocation8] sm:$0xff]
    %v80 = vld [vmem:[#allocation8 + $0x8] sm:$0xff]
    %v81 = vld [vmem:[#allocation8 + $0x10] sm:$0xff]
    %v82 = vld [vmem:[#allocation8 + $0x18] sm:$0xff]
    %v83 = vld [vmem:[#allocation8 + $0x20] sm:$0xff]
    %v84 = vld [vmem:[#allocation8 + $0x28] sm:$0xff]
    %v85 = vld [vmem:[#allocation8 + $0x30] sm:$0xff]
    %v86 = vld [vmem:[#allocation8 + $0x38] sm:$0xff]
    %v87 = vld [vmem:[#allocation8 + $0x40] sm:$0xff]
    %v88 = vld [vmem:[#allocation8 + $0x48] sm:$0xff]
    %v89 = vld [vmem:[#allocation8 + $0x50] sm:$0xff]
    %v90 = vld [vmem:[#allocation8 + $0x58] sm:$0xff]
    %v91 = vld [vmem:[#allocation8 + $0x60] sm:$0xff]
    %v92 = vld [vmem:[#allocation8 + $0x68] sm:$0xff]
    %v93 = vld [vmem:[#allocation8 + $0x70] sm:$0xff]
    %v94 = vld [vmem:[#allocation8 + $0x78] sm:$0xff]
    %vm95 = vcmp.ge.u32.totalorder %v79, 2147483648
    %vm96 = vcmp.ge.u32.totalorder %v80, 2147483648
    %vm97 = vcmp.ge.u32.totalorder %v81, 2147483648
    %vm98 = vcmp.ge.u32.totalorder %v82, 2147483648
    %vm99 = vcmp.ge.u32.totalorder %v83, 2147483648
    %vm100 = vcmp.ge.u32.totalorder %v84, 2147483648
    %vm101 = vcmp.ge.u32.totalorder %v85, 2147483648
    %vm102 = vcmp.ge.u32.totalorder %v86, 2147483648
    %vm103 = vcmp.ge.u32.totalorder %v87, 2147483648
    %vm104 = vcmp.ge.u32.totalorder %v88, 2147483648
    %vm105 = vcmp.ge.u32.totalorder %v89, 2147483648
    %vm106 = vcmp.ge.u32.totalorder %v90, 2147483648
    %vm107 = vcmp.ge.u32.totalorder %v91, 2147483648
    %vm108 = vcmp.ge.u32.totalorder %v92, 2147483648
    %vm109 = vcmp.ge.u32.totalorder %v93, 2147483648
    %vm110 = vcmp.ge.u32.totalorder %v94, 2147483648
    %v111 = vmul.f32 %v63, 2.0
    %v112 = vmul.f32 %v64, 2.0
    %v113 = vmul.f32 %v65, 2.0
    %v114 = vmul.f32 %v66, 2.0
    %v115 = vmul.f32 %v67, 2.0
    %v116 = vmul.f32 %v68, 2.0
    %v117 = vmul.f32 %v69, 2.0
    %v118 = vmul.f32 %v70, 2.0
    %v119 = vmul.f32 %v71, 2.0
    %v120 = vmul.f32 %v72, 2.0
    %v121 = vmul.f32 %v73, 2.0
    %v122 = vmul.f32 %v74, 2.0
    %v123 = vmul.f32 %v75, 2.0
    %v124 = vmul.f32 %v76, 2.0
    %v125 = vmul.f32 %v77, 2.0
    %v126 = vmul.f32 %v78, 2.0
    %v127 = vsel %vm95, %v111, 0.0
    %v128 = vsel %vm96, %v112, 0.0
    %v129 = vsel %vm97, %v113, 0.0
    %v130 = vsel %vm98, %v114, 0.0
    %v131 = vsel %vm99, %v115, 0.0
    %v132 = vsel %vm100, %v116, 0.0
    %v133 = vsel %vm101, %v117, 0.0
    %v134 = vsel %vm102, %v118, 0.0
    %v135 = vsel %vm103, %v119, 0.0
    %v136 = vsel %vm104, %v120, 0.0
    %v137 = vsel %vm105, %v121, 0.0
    %v138 = vsel %vm106, %v122, 0.0
    %v139 = vsel %vm107, %v123, 0.0
    %v140 = vsel %vm108, %v124, 0.0
    %v141 = vsel %vm109, %v125, 0.0
    %v142 = vsel %vm110, %v126, 0.0
    %v143 = vld [vmem:[#allocation2] sm:$0xff]
    %v144 = vld [vmem:[#allocation3] sm:$0xff]
    %v145 = vpack.c.bf16 %v144, %v144
    %v146 = vpack.c.bf16 %v128, %v127
    %v147 = vpack.c.bf16 %v130, %v129
    %v148 = vpack.c.bf16 %v132, %v131
    %v149 = vpack.c.bf16 %v134, %v133
    %v150 = vpack.c.bf16 %v136, %v135
    %v151 = vpack.c.bf16 %v138, %v137
    %v152 = vpack.c.bf16 %v140, %v139
    %v153 = vpack.c.bf16 %v142, %v141
    %154 = vmatprep.subr.bf16.mxu0 0
    %155 = vmatpush1.bf16.msra.mxu0 %v146
    %156 = vmatprep.subr.bf16.mxu0 0
    %157 = vmatpush1.bf16.msra.mxu0 %v147
    %158 = vmatprep.subr.bf16.mxu0 0
    %159 = vmatpush1.bf16.msra.mxu0 %v148
    %160 = vmatprep.subr.bf16.mxu0 0
    %161 = vmatpush1.bf16.msra.mxu0 %v149
    %162 = vmatprep.subr.bf16.mxu0 0
    %163 = vmatpush1.bf16.msra.mxu0 %v150
    %164 = vmatprep.subr.bf16.mxu0 0
    %165 = vmatpush1.bf16.msra.mxu0 %v151
    %166 = vmatprep.subr.bf16.mxu0 0
    %167 = vmatpush1.bf16.msra.mxu0 %v152
    %168 = vmatprep.subr.bf16.mxu0 0
    %169 = vmatpush1.bf16.msra.mxu0 %v153
    %170 = vmatprep.subr.bf16.mxu0 0
    %171 = vmatpush1.bf16.msra.mxu0 0
    %172 = vmatprep.subr.bf16.mxu0 0
    %173 = vmatpush1.bf16.msra.mxu0 0
    %174 = vmatprep.subr.bf16.mxu0 0
    %175 = vmatpush1.bf16.msra.mxu0 0
    %176 = vmatprep.subr.bf16.mxu0 0
    %177 = vmatpush1.bf16.msra.mxu0 0
    %178 = vmatprep.subr.bf16.mxu0 0
    %179 = vmatpush1.bf16.msra.mxu0 0
    %180 = vmatprep.subr.bf16.mxu0 0
    %181 = vmatpush1.bf16.msra.mxu0 0
    %182 = vmatprep.subr.bf16.mxu0 0
    %183 = vmatpush1.bf16.msra.mxu0 0
    %184 = vmatprep.subr.bf16.mxu0 0
    %185 = vmatpush1.bf16.msra.mxu0 0
    %186 = vmatprep.mubr.bf16.mxu0 0
    %187 = vmatmul.mubr.bf16.gmra.mrb[0].mxu0 %v145
    %v188 = vpop.f32.mrb[0].mxu0
    %v189 = vadd.f32 0.0, %v188
    %v190 = vpop.f32.mrb[0].mxu0
    %v191 = vpop.f32.mrb[0].mxu0
    %v192 = vpop.f32.mrb[0].mxu0
    %193 = vdwg.mxu0
    %v194 = vadd.f32 %v143, %v189
    %195 = vst [vmem:[#allocation2] sm:$0xff] %v194
    // Predicated region
    $region34: #{tpu_custom_call.1} parent=1 // pred_check
      %p196 = pneg %p58
    $region35: #{tpu_custom_call.1} parent=1 // pred_check_branch
      %198 = sbr.rel (%p196) target = $region37
    $region36: #{tpu_custom_call.1} parent=1 // pred_region
      %v199 = vld [vmem:[#allocation2] sm:$0xff]
      %v200 = vld [vmem:[%s3] sm:$0x1]
      %v202 = vlaneseq
      %v203 = vshrl.u32 %v202, 7
      %v204 = vsub.s32 0, %v203
      %v205 = vrot.slane %v200, %v204
      %v207 = vadd.f32 %v199, %v205
      %208 = vst [vmem:[#allocation9] sm:$0xff] %v207
    $region37: #{tpu_custom_call.1} parent=1 // pred_fallthru
      _
    // Predicated region
    $region38: #{tpu_custom_call.1} parent=1 // pred_check
      _
    $region39: #{tpu_custom_call.1} parent=1 // pred_check_branch
      %210 = sbr.rel (0) target = $region41
    $region40: #{tpu_custom_call.1} parent=1 // pred_region
      %s212 = ssub.s32 128, 128
      %213 = vsyncadd [#allocation5], %s212
      %s215 = sshll.u32 [#allocation9], 4
      %s216 = int_to_ptr.vmem [resolvable:$true] %s215
      %218 = dma.vmem_to_hbm [thread:$0]  %s216, 128, %s4, [#allocation5]
    $region41: #{tpu_custom_call.1} parent=1 // pred_fallthru
      _
    // Predicated region
    $region42: #{tpu_custom_call.1} parent=1 // pred_check
      _
    $region43: #{tpu_custom_call.1} parent=1 // pred_check_branch
      %220 = sbr.rel (0) target = $region45
    $region44: #{tpu_custom_call.1} parent=1 // pred_region
      %221 = dma.done [#allocation5], 128
    $region45: #{tpu_custom_call.1} parent=1 // pred_fallthru
      _
    %222 = vsyncpa [#allocation4], 1
    %223 = vsyncpa [#allocation7], 1
    %224 = vsyncpa [#allocation5], 1

</llo_original>
